<compile_context>
chip_gen: v5e
topology: v5e:2x2
jax: 0.10.0
libtpu: 0.0.40
codegen_flags: <defaults>
</compile_context>

<pallas_src>
import jax
import jax.numpy as jnp
import numpy as np
from jax import lax
from jax.experimental import pallas as pl
from jax.experimental.pallas import tpu as pltpu


def _round_up(x, m):
    return (x + m - 1) // m * m


def noisy_layer_kernel(x_ref, mu_w_ref, sg_w_ref, mu_b_ref, sg_b_ref,
                       eps_i_ref, eps_j_ref, out_ref, acc_ref):
    """One (TO, TK) weight tile. grid = (n_out_tiles, n_in_tiles); axis 1 = reduction."""
    k = pl.program_id(1)

    @pl.when(k == 0)
    def _():
        acc_ref[...] = jnp.zeros_like(acc_ref)

    x = x_ref[...]                                   # (B, TK), compute dtype
    xs = x * eps_i_ref[...]                          # VPU broadcast, replaces MXU outer product
    dn = (((1,), (1,)), ((), ()))                    # contract n_in(x) with n_in(W): x @ W.T
    p_mu = lax.dot_general(x, mu_w_ref[...], dn,
                           preferred_element_type=jnp.float32)        # (B, TO)
    p_sg = lax.dot_general(xs, sg_w_ref[...], dn,
                           preferred_element_type=jnp.float32)        # (B, TO)
    acc_ref[...] += p_mu + p_sg * eps_j_ref[...]     # eps_j broadcast over batch (f32)

    @pl.when(k == pl.num_programs(1) - 1)
    def _():
        bias = mu_b_ref[...] + sg_b_ref[...] * eps_j_ref[...]         # (1, TO), once per j-tile
        out_ref[...] = (acc_ref[...] + bias).astype(out_ref.dtype)


def noisy_layer(x, mu_w, sigma_w, mu_b, sigma_b, eps_i, eps_j,
                *, compute_dtype=jnp.float32):
    """Pallas TPU NoisyLayer forward. Returns (n_out, B), matching the PyTorch module."""
    B, n_in = x.shape
    n_out = mu_w.shape[0]

    # 128-aligned tiles (v5e MXU granularity; multiples also map to v6e/v7x 256-wide MXU).
    TO = 256 if n_out >= 256 else 128
    TK = 256 if n_in >= 256 else 128
    Bp = _round_up(max(B, 8), 8)
    n_out_p = _round_up(n_out, TO)
    n_in_p = _round_up(n_in, TK)

    def pad2(a, r, c):
        return jnp.pad(a, ((0, r - a.shape[0]), (0, c - a.shape[1])))

    # Zero padding is exact: padded input columns hit zero weights; padded output
    # columns / batch rows are sliced off below.
    x_p = pad2(x.astype(compute_dtype), Bp, n_in_p)
    mu_w_p = pad2(mu_w.astype(compute_dtype), n_out_p, n_in_p)
    sg_w_p = pad2(sigma_w.astype(compute_dtype), n_out_p, n_in_p)
    eps_i_row = pad2(eps_i.reshape(1, n_in).astype(compute_dtype), 1, n_in_p)
    eps_j_row = pad2(eps_j.reshape(1, n_out).astype(jnp.float32), 1, n_out_p)
    mu_b_row = pad2(mu_b.reshape(1, n_out).astype(jnp.float32), 1, n_out_p)
    sg_b_row = pad2(sigma_b.reshape(1, n_out).astype(jnp.float32), 1, n_out_p)

    grid = (n_out_p // TO, n_in_p // TK)             # reduction axis (n_in) last

    out_padded = pl.pallas_call(
        noisy_layer_kernel,
        out_shape=jax.ShapeDtypeStruct((Bp, n_out_p), jnp.float32),
        grid_spec=pltpu.PrefetchScalarGridSpec(
            num_scalar_prefetch=0,
            grid=grid,
            in_specs=[
                pl.BlockSpec((Bp, TK), lambda j, k: (0, k)),   # x
                pl.BlockSpec((TO, TK), lambda j, k: (j, k)),   # mu_w
                pl.BlockSpec((TO, TK), lambda j, k: (j, k)),   # sigma_w
                pl.BlockSpec((1, TO), lambda j, k: (0, j)),    # mu_b   (row)
                pl.BlockSpec((1, TO), lambda j, k: (0, j)),    # sigma_b(row)
                pl.BlockSpec((1, TK), lambda j, k: (0, k)),    # eps_i  (row)
                pl.BlockSpec((1, TO), lambda j, k: (0, j)),    # eps_j  (row)
            ],
            out_specs=pl.BlockSpec((Bp, TO), lambda j, k: (0, j)),   # lane-dense (B, n_out)
            scratch_shapes=[pltpu.VMEM((Bp, TO), jnp.float32)],
        ),
        compiler_params=pltpu.CompilerParams(
            dimension_semantics=("parallel", "arbitrary"),
            vmem_limit_bytes=32 * 1024 * 1024,
        ),
    )(x_p, mu_w_p, sg_w_p, mu_b_row, sg_b_row, eps_i_row, eps_j_row)

    # PyTorch-style (n_out, B) layout is produced wrapper-side (XLA layout plumbing).
    return out_padded[:B, :n_out].T


def f_noise(z):
    # f(x) = sign(x) * sqrt(|x|)
    return jnp.sign(z) * jnp.sqrt(jnp.abs(z))


def make_params(key, n_inputs, n_outputs):
    k_mu_w, k_mu_b, k_ei, k_ej = jax.random.split(key, 4)
    bound = 1.0 / np.sqrt(n_inputs)
    mu_w = jax.random.uniform(k_mu_w, (n_outputs, n_inputs),
                              minval=-bound, maxval=bound, dtype=jnp.float32)
    sigma_w = jnp.full((n_outputs, n_inputs), 0.5 / np.sqrt(n_inputs), jnp.float32)
    mu_b = jax.random.uniform(k_mu_b, (n_outputs, 1),
                              minval=-bound, maxval=bound, dtype=jnp.float32)
    sigma_b = jnp.full((n_outputs, 1), 0.5 / np.sqrt(n_outputs), jnp.float32)
    # reset_noise(): factored Gaussian noise through f, kept as column vectors
    eps_i = f_noise(jax.random.normal(k_ei, (n_inputs,), jnp.float32)).reshape(-1, 1)
    eps_j = f_noise(jax.random.normal(k_ej, (n_outputs,), jnp.float32)).reshape(-1, 1)
    return mu_w, sigma_w, mu_b, sigma_b, eps_i, eps_j


def reference(x, mu_w, sigma_w, mu_b, sigma_b, eps_i, eps_j):
    w = mu_w + sigma_w * (eps_j @ eps_i.T)
    b = mu_b + sigma_b * eps_j
    return (x @ w.T).T + b


if __name__ == "__main__":
    n_inputs, n_outputs, batch = 32, 16, 8
    key = jax.random.PRNGKey(0)
    k_x, k_p = jax.random.split(key)

    x = jax.random.normal(k_x, (batch, n_inputs), jnp.float32)
    params = make_params(k_p, n_inputs, n_outputs)
    mu_w, sigma_w, mu_b, sigma_b, eps_i, eps_j = params

    # f32 compute path: exact semantics, checked tightly against the reference.
    out = noisy_layer(x, *params, compute_dtype=jnp.float32)
    out = jax.block_until_ready(out)
    ref = reference(x, mu_w, sigma_w, mu_b, sigma_b, eps_i, eps_j)
    np.testing.assert_allclose(np.asarray(out), np.asarray(ref), rtol=1e-5, atol=1e-5)
    assert out.shape == (n_outputs, batch)

    # bf16 matmul-input path (recommended on v6e/v7x: halves weight HBM traffic,
    # full MXU bf16 rate; accumulation stays f32). Sanity-run only.
    out_bf16 = jax.block_until_ready(noisy_layer(x, *params, compute_dtype=jnp.bfloat16))
    assert out_bf16.shape == (n_outputs, batch)
    assert bool(jnp.all(jnp.isfinite(out_bf16)))

    print("KERNEL_OK")
</pallas_src>

<mosaic_0001>
module attributes {stable_mosaic.version = 11 : i64} {
  func.func @noisy_layer_kernel(%arg0: i32, %arg1: i32, %arg2: memref<8x128xf32, #tpu.memory_space<vmem>>, %arg3: memref<128x128xf32, #tpu.memory_space<vmem>>, %arg4: memref<128x128xf32, #tpu.memory_space<vmem>>, %arg5: memref<1x128xf32, #tpu.memory_space<vmem>>, %arg6: memref<1x128xf32, #tpu.memory_space<vmem>>, %arg7: memref<1x128xf32, #tpu.memory_space<vmem>>, %arg8: memref<1x128xf32, #tpu.memory_space<vmem>>, %arg9: memref<8x128xf32, #tpu.memory_space<vmem>>, %arg10: memref<8x128xf32, #tpu.memory_space<vmem>>) attributes {dimension_semantics = [#tpu.dimension_semantics<parallel>, #tpu.dimension_semantics<arbitrary>], iteration_bounds = array<i64: 1, 1>, scalar_prefetch = 0 : i64, scratch_operands = 1 : i64, tpu.core_type = #tpu.core_type<tc>, window_params = [{transform_indices = @transform_0, window_bounds = array<i64: 8, 128>}, {transform_indices = @transform_1, window_bounds = array<i64: 128, 128>}, {transform_indices = @transform_2, window_bounds = array<i64: 128, 128>}, {transform_indices = @transform_3, window_bounds = array<i64: 1, 128>}, {transform_indices = @transform_4, window_bounds = array<i64: 1, 128>}, {transform_indices = @transform_5, window_bounds = array<i64: 1, 128>}, {transform_indices = @transform_6, window_bounds = array<i64: 1, 128>}, {transform_indices = @transform_7, window_bounds = array<i64: 8, 128>}]} {
    %c0_i32 = arith.constant 0 : i32
    %0 = arith.cmpi eq, %arg1, %c0_i32 : i32
    %1 = arith.extui %0 : i1 to i32
    %c0_i32_0 = arith.constant 0 : i32
    %2 = arith.cmpi ne, %1, %c0_i32_0 : i32
    scf.if %2 {
      %cst_17 = arith.constant 0.000000e+00 : f32
      %21 = vector.broadcast %cst_17 : f32 to vector<8x128xf32>
      %c0_18 = arith.constant 0 : index
      %c0_19 = arith.constant 0 : index
      %22 = vector.load %arg10[%c0_18, %c0_19] : memref<8x128xf32, #tpu.memory_space<vmem>>, vector<8x128xf32>
      tpu.vector_store %arg10[%c0_18, %c0_19], %21 {strides = array<i32>} : memref<8x128xf32, #tpu.memory_space<vmem>>, vector<8x128xf32>,
    } else {
    }
    %c0 = arith.constant 0 : index
    %c0_1 = arith.constant 0 : index
    %3 = vector.load %arg2[%c0, %c0_1] : memref<8x128xf32, #tpu.memory_space<vmem>>, vector<8x128xf32>
    %c0_2 = arith.constant 0 : index
    %c0_3 = arith.constant 0 : index
    %4 = vector.load %arg7[%c0_2, %c0_3] : memref<1x128xf32, #tpu.memory_space<vmem>>, vector<1x128xf32>
    %5 = vector.broadcast %4 : vector<1x128xf32> to vector<8x128xf32>
    %6 = arith.mulf %3, %5 : vector<8x128xf32>
    %c0_4 = arith.constant 0 : index
    %c0_5 = arith.constant 0 : index
    %7 = vector.load %arg3[%c0_4, %c0_5] : memref<128x128xf32, #tpu.memory_space<vmem>>, vector<128x128xf32>
    %cst = arith.constant dense<0.000000e+00> : vector<8x128xf32>
    %8 = tpu.matmul %3, %7, %cst {dimension_numbers = #tpu.dot_dimension_numbers<[1], [1], [0], [0], [0, 0, 1, 0], [], []>} : vector<8x128xf32>, vector<128x128xf32>, vector<8x128xf32> -> vector<8x128xf32>
    %c0_6 = arith.constant 0 : index
    %c0_7 = arith.constant 0 : index
    %9 = vector.load %arg4[%c0_6, %c0_7] : memref<128x128xf32, #tpu.memory_space<vmem>>, vector<128x128xf32>
    %cst_8 = arith.constant dense<0.000000e+00> : vector<8x128xf32>
    %10 = tpu.matmul %6, %9, %cst_8 {dimension_numbers = #tpu.dot_dimension_numbers<[1], [1], [0], [0], [0, 0, 1, 0], [], []>} : vector<8x128xf32>, vector<128x128xf32>, vector<8x128xf32> -> vector<8x128xf32>
    %c0_9 = arith.constant 0 : index
    %c0_10 = arith.constant 0 : index
    %11 = vector.load %arg10[%c0_9, %c0_10] : memref<8x128xf32, #tpu.memory_space<vmem>>, vector<8x128xf32>
    %c0_11 = arith.constant 0 : index
    %c0_12 = arith.constant 0 : index
    %12 = vector.load %arg8[%c0_11, %c0_12] : memref<1x128xf32, #tpu.memory_space<vmem>>, vector<1x128xf32>
    %13 = vector.broadcast %12 : vector<1x128xf32> to vector<8x128xf32>
    %14 = arith.mulf %10, %13 : vector<8x128xf32>
    %15 = arith.addf %8, %14 : vector<8x128xf32>
    %16 = arith.addf %11, %15 : vector<8x128xf32>
    %c0_13 = arith.constant 0 : index
    %c0_14 = arith.constant 0 : index
    %17 = vector.load %arg10[%c0_13, %c0_14] : memref<8x128xf32, #tpu.memory_space<vmem>>, vector<8x128xf32>
    tpu.vector_store %arg10[%c0_13, %c0_14], %16 {strides = array<i32>} : memref<8x128xf32, #tpu.memory_space<vmem>>, vector<8x128xf32>,
    %c0_i32_15 = arith.constant 0 : i32
    %18 = arith.cmpi eq, %arg1, %c0_i32_15 : i32
    %19 = arith.extui %18 : i1 to i32
    %c0_i32_16 = arith.constant 0 : i32
    %20 = arith.cmpi ne, %19, %c0_i32_16 : i32
    scf.if %20 {
      %c0_17 = arith.constant 0 : index
      %c0_18 = arith.constant 0 : index
      %21 = vector.load %arg5[%c0_17, %c0_18] : memref<1x128xf32, #tpu.memory_space<vmem>>, vector<1x128xf32>
      %c0_19 = arith.constant 0 : index
      %c0_20 = arith.constant 0 : index
      %22 = vector.load %arg6[%c0_19, %c0_20] : memref<1x128xf32, #tpu.memory_space<vmem>>, vector<1x128xf32>
      %c0_21 = arith.constant 0 : index
      %c0_22 = arith.constant 0 : index
      %23 = vector.load %arg8[%c0_21, %c0_22] : memref<1x128xf32, #tpu.memory_space<vmem>>, vector<1x128xf32>
      %24 = arith.mulf %22, %23 : vector<1x128xf32>
      %25 = arith.addf %21, %24 : vector<1x128xf32>
      %c0_23 = arith.constant 0 : index
      %c0_24 = arith.constant 0 : index
      %26 = vector.load %arg10[%c0_23, %c0_24] : memref<8x128xf32, #tpu.memory_space<vmem>>, vector<8x128xf32>
      %27 = vector.broadcast %25 : vector<1x128xf32> to vector<8x128xf32>
      %28 = arith.addf %26, %27 : vector<8x128xf32>
      %c0_25 = arith.constant 0 : index
      %c0_26 = arith.constant 0 : index
      %29 = vector.load %arg9[%c0_25, %c0_26] : memref<8x128xf32, #tpu.memory_space<vmem>>, vector<8x128xf32>
      tpu.vector_store %arg9[%c0_25, %c0_26], %28 {strides = array<i32>} : memref<8x128xf32, #tpu.memory_space<vmem>>, vector<8x128xf32>,
    } else {
    }
    return
  }
  func.func @transform_0(%arg0: i32, %arg1: i32) -> (i32, i32) {
    %c0_i32 = arith.constant 0 : i32
    %c0_i32_0 = arith.constant 0 : i32
    return %c0_i32, %arg1 : i32, i32
  }
  func.func @transform_1(%arg0: i32, %arg1: i32) -> (i32, i32) {
    %c0_i32 = arith.constant 0 : i32
    return %arg0, %arg1 : i32, i32
  }
  func.func @transform_2(%arg0: i32, %arg1: i32) -> (i32, i32) {
    %c0_i32 = arith.constant 0 : i32
    return %arg0, %arg1 : i32, i32
  }
  func.func @transform_3(%arg0: i32, %arg1: i32) -> (i32, i32) {
    %c0_i32 = arith.constant 0 : i32
    %c0_i32_0 = arith.constant 0 : i32
    return %c0_i32, %arg0 : i32, i32
  }
  func.func @transform_4(%arg0: i32, %arg1: i32) -> (i32, i32) {
    %c0_i32 = arith.constant 0 : i32
    %c0_i32_0 = arith.constant 0 : i32
    return %c0_i32, %arg0 : i32, i32
  }
  func.func @transform_5(%arg0: i32, %arg1: i32) -> (i32, i32) {
    %c0_i32 = arith.constant 0 : i32
    %c0_i32_0 = arith.constant 0 : i32
    return %c0_i32, %arg1 : i32, i32
  }
  func.func @transform_6(%arg0: i32, %arg1: i32) -> (i32, i32) {
    %c0_i32 = arith.constant 0 : i32
    %c0_i32_0 = arith.constant 0 : i32
    return %c0_i32, %arg0 : i32, i32
  }
  func.func @transform_7(%arg0: i32, %arg1: i32) -> (i32, i32) {
    %c0_i32 = arith.constant 0 : i32
    %c0_i32_0 = arith.constant 0 : i32
    return %c0_i32, %arg0 : i32, i32
  }
}

</mosaic_0001>

<llo_original>
// kernel: tpu_custom_call.1
$region0: #{tpu_custom_call.1}
  #allocation0 [shape = 'u32[]', space=smem, size = 0x4, offset = 0x4, fixed_abs, tag = 'smem constant byte address 0x4 - core index']
  #allocation1 [shape = 'u32[72,128]{1,0:T(1,128)}', space=vmem, size = 0x9000, scoped, tag = 'internal scratch']
  #allocation2 [shape = 'f32[8,128]{1,0:T(8,128)}', space=vmem, size = 0x1000, scoped, tag = 'scratch operand']
  %s0 = inlined_call_operand.hbm [shape: f32[8,128], index: 0, kind: input, shape index: {}]
  %s1 = inlined_call_operand.hbm [shape: f32[128,128], index: 1, kind: input, shape index: {}]
  %s2 = inlined_call_operand.hbm [shape: f32[128,128], index: 2, kind: input, shape index: {}]
  %s3 = inlined_call_operand.vmem [shape: f32[1,128], index: 3, kind: input, shape index: {}]
  %s4 = inlined_call_operand.vmem [shape: f32[1,128], index: 4, kind: input, shape index: {}]
  %s5 = inlined_call_operand.vmem [shape: f32[1,128], index: 5, kind: input, shape index: {}]
  %s6 = inlined_call_operand.vmem [shape: f32[1,128], index: 6, kind: input, shape index: {}]
  %s7 = inlined_call_operand.hbm [shape: f32[8,128], index: 7, kind: output, shape index: {}]
  %s8 = sld [smem:[#allocation0]]
  $region58: #{tpu_custom_call.1} parent=0
    _
  %s10 = ssub.s32 1, %s8
  %s11 = scalar_select 0, %s10, %s8
  $region1: #{tpu_custom_call.1} parent=0
    #allocation3 [shape = 'u8[4096]{0}', space=vmem, size = 0x1000, scoped, tag = 'input window, operand 0, single buffered']
    #allocation4 [shape = 's32[1]{0}', space=sflag, size = 0x4, scoped, tag = 'scoped memory for tpu_custom_call.1']
    #allocation5 [shape = 's32[1]{0}', space=sflag, size = 0x4, scoped, tag = 'scoped memory for tpu_custom_call.1']
    #allocation6 [shape = 'u8[65536]{0}', space=vmem, size = 0x10000, scoped, tag = 'input window, operand 1, single buffered']
    #allocation7 [shape = 's32[1]{0}', space=sflag, size = 0x4, scoped, tag = 'scoped memory for tpu_custom_call.1']
    #allocation8 [shape = 'u8[65536]{0}', space=vmem, size = 0x10000, scoped, tag = 'input window, operand 2, single buffered']
    #allocation9 [shape = 'u8[4096]{0}', space=vmem, size = 0x1000, scoped, tag = 'output window, operand 0, single buffered']
    %12 = vsyncpa [#allocation4], 0
    %13 = vsyncpa [#allocation7], 0
    %14 = vsyncpa [#allocation5], 0
    // Predicated region
    $region2: #{tpu_custom_call.1} parent=1 // pred_check
      _
    $region3: #{tpu_custom_call.1} parent=1 // pred_check_branch
      %16 = sbr.rel (0) target = $region5
    $region4: #{tpu_custom_call.1} parent=1 // pred_region
      %18 = vsyncadd [#allocation4], 0
      %s20 = sshll.u32 %s0, 4
      %s21 = int_to_ptr.hbm [resolvable:$true] %s20
      %s22 = sshll.u32 [#allocation3], 4
      %s23 = int_to_ptr.vmem [resolvable:$true] %s22
      %25 = dma.hbm_to_vmem [thread:$0]  %s21, 128, %s23, [#allocation4]
    $region5: #{tpu_custom_call.1} parent=1 // pred_fallthru
      _
    // Predicated region
    $region6: #{tpu_custom_call.1} parent=1 // pred_check
      _
    $region7: #{tpu_custom_call.1} parent=1 // pred_check_branch
      %27 = sbr.rel (0) target = $region9
    $region8: #{tpu_custom_call.1} parent=1 // pred_region
      %29 = vsyncadd [#allocation7], 0
      %s30 = sshll.u32 %s1, 4
      %s31 = int_to_ptr.hbm [resolvable:$true] %s30
      %s32 = sshll.u32 [#allocation6], 4
      %s33 = int_to_ptr.vmem [resolvable:$true] %s32
      %38 = dma.hbm_to_vmem [thread:$0]  %s31, 2048, %s33, [#allocation7], 128, 128, 8
    $region9: #{tpu_custom_call.1} parent=1 // pred_fallthru
      _
    // Predicated region
    $region10: #{tpu_custom_call.1} parent=1 // pred_check
      _
    $region11: #{tpu_custom_call.1} parent=1 // pred_check_branch
      %40 = sbr.rel (0) target = $region13
    $region12: #{tpu_custom_call.1} parent=1 // pred_region
      %42 = vsyncadd [#allocation7], 0
      %s43 = sshll.u32 %s2, 4
      %s44 = int_to_ptr.hbm [resolvable:$true] %s43
      %s45 = sshll.u32 [#allocation8], 4
      %s46 = int_to_ptr.vmem [resolvable:$true] %s45
      %51 = dma.hbm_to_vmem [thread:$0]  %s44, 2048, %s46, [#allocation7], 128, 128, 8
    $region13: #{tpu_custom_call.1} parent=1 // pred_fallthru
      _
    // Predicated region
    $region14: #{tpu_custom_call.1} parent=1 // pred_check
      _
    $region15: #{tpu_custom_call.1} parent=1 // pred_check_branch
      %53 = sbr.rel (0) target = $region17
    $region16: #{tpu_custom_call.1} parent=1 // pred_region
      _
    $region17: #{tpu_custom_call.1} parent=1 // pred_fallthru
      _
    // Predicated region
    $region18: #{tpu_custom_call.1} parent=1 // pred_check
      _
    $region19: #{tpu_custom_call.1} parent=1 // pred_check_branch
      %55 = sbr.rel (0) target = $region21
    $region20: #{tpu_custom_call.1} parent=1 // pred_region
      _
    $region21: #{tpu_custom_call.1} parent=1 // pred_fallthru
      _
    // Predicated region
    $region22: #{tpu_custom_call.1} parent=1 // pred_check
      _
    $region23: #{tpu_custom_call.1} parent=1 // pred_check_branch
      %57 = sbr.rel (0) target = $region25
    $region24: #{tpu_custom_call.1} parent=1 // pred_region
      _
    $region25: #{tpu_custom_call.1} parent=1 // pred_fallthru
      _
    // Predicated region
    $region26: #{tpu_custom_call.1} parent=1 // pred_check
      _
    $region27: #{tpu_custom_call.1} parent=1 // pred_check_branch
      %59 = sbr.rel (0) target = $region29
    $region28: #{tpu_custom_call.1} parent=1 // pred_region
      _
    $region29: #{tpu_custom_call.1} parent=1 // pred_fallthru
      _
    // Predicated region
    $region30: #{tpu_custom_call.1} parent=1 // pred_check
      _
    $region31: #{tpu_custom_call.1} parent=1 // pred_check_branch
      %61 = sbr.rel (0) target = $region33
    $region32: #{tpu_custom_call.1} parent=1 // pred_region
      %63 = dma.done [#allocation4], 128
    $region33: #{tpu_custom_call.1} parent=1 // pred_fallthru
      _
    // Predicated region
    $region34: #{tpu_custom_call.1} parent=1 // pred_check
      _
    $region35: #{tpu_custom_call.1} parent=1 // pred_check_branch
      %65 = sbr.rel (0) target = $region37
    $region36: #{tpu_custom_call.1} parent=1 // pred_region
      %67 = dma.done [#allocation7], 2048
    $region37: #{tpu_custom_call.1} parent=1 // pred_fallthru
      _
    // Predicated region
    $region38: #{tpu_custom_call.1} parent=1 // pred_check
      _
    $region39: #{tpu_custom_call.1} parent=1 // pred_check_branch
      %69 = sbr.rel (0) target = $region41
    $region40: #{tpu_custom_call.1} parent=1 // pred_region
      %71 = dma.done [#allocation7], 2048
    $region41: #{tpu_custom_call.1} parent=1 // pred_fallthru
      _
    %p72 = scmp.eq.s32.totalorder 0, 0
    // Predicated region
    $region42: #{tpu_custom_call.1} parent=1 // pred_check
      %p73 = pneg %p72
    $region43: #{tpu_custom_call.1} parent=1 // pred_check_branch
      %75 = sbr.rel (%p73) target = $region45
    $region44: #{tpu_custom_call.1} parent=1 // pred_region
      %76 = vst [vmem:[#allocation2] sm:$0xff] 0.0
    $region45: #{tpu_custom_call.1} parent=1 // pred_fallthru
      _
    %v77 = vld [vmem:[#allocation3] sm:$0xff]
    %v78 = vld [vmem:[%s5] sm:$0x1]
    %v80 = vperm.slane %v78, 0
    %v82 = vmul.f32 %v77, %v80
    %v83 = vld [vmem:[#allocation6] sm:$0xff]
    %v84 = vld [vmem:[#allocation6 + $0x8] sm:$0xff]
    %v85 = vld [vmem:[#allocation6 + $0x10] sm:$0xff]
    %v86 = vld [vmem:[#allocation6 + $0x18] sm:$0xff]
    %v87 = vld [vmem:[#allocation6 + $0x20] sm:$0xff]
    %v88 = vld [vmem:[#allocation6 + $0x28] sm:$0xff]
    %v89 = vld [vmem:[#allocation6 + $0x30] sm:$0xff]
    %v90 = vld [vmem:[#allocation6 + $0x38] sm:$0xff]
    %v91 = vld [vmem:[#allocation6 + $0x40] sm:$0xff]
    %v92 = vld [vmem:[#allocation6 + $0x48] sm:$0xff]
    %v93 = vld [vmem:[#allocation6 + $0x50] sm:$0xff]
    %v94 = vld [vmem:[#allocation6 + $0x58] sm:$0xff]
    %v95 = vld [vmem:[#allocation6 + $0x60] sm:$0xff]
    %v96 = vld [vmem:[#allocation6 + $0x68] sm:$0xff]
    %v97 = vld [vmem:[#allocation6 + $0x70] sm:$0xff]
    %v98 = vld [vmem:[#allocation6 + $0x78] sm:$0xff]
    %v99 = vld [vmem:[#allocation8] sm:$0xff]
    %v100 = vld [vmem:[#allocation8 + $0x8] sm:$0xff]
    %v101 = vld [vmem:[#allocation8 + $0x10] sm:$0xff]
    %v102 = vld [vmem:[#allocation8 + $0x18] sm:$0xff]
    %v103 = vld [vmem:[#allocation8 + $0x20] sm:$0xff]
    %v104 = vld [vmem:[#allocation8 + $0x28] sm:$0xff]
    %v105 = vld [vmem:[#allocation8 + $0x30] sm:$0xff]
    %v106 = vld [vmem:[#allocation8 + $0x38] sm:$0xff]
    %v107 = vld [vmem:[#allocation8 + $0x40] sm:$0xff]
    %v108 = vld [vmem:[#allocation8 + $0x48] sm:$0xff]
    %v109 = vld [vmem:[#allocation8 + $0x50] sm:$0xff]
    %v110 = vld [vmem:[#allocation8 + $0x58] sm:$0xff]
    %v111 = vld [vmem:[#allocation8 + $0x60] sm:$0xff]
    %v112 = vld [vmem:[#allocation8 + $0x68] sm:$0xff]
    %v113 = vld [vmem:[#allocation8 + $0x70] sm:$0xff]
    %v114 = vld [vmem:[#allocation8 + $0x78] sm:$0xff]
    %115 = vmatpush.xpose.msra.mxu0 %v114
    %116 = vmatpush.xpose.msra.mxu0 %v113
    %117 = vmatpush.xpose.msra.mxu0 %v112
    %118 = vmatpush.xpose.msra.mxu0 %v111
    %119 = vmatpush.xpose.msra.mxu0 %v110
    %120 = vmatpush.xpose.msra.mxu0 %v109
    %121 = vmatpush.xpose.msra.mxu0 %v108
    %122 = vmatpush.xpose.msra.mxu0 %v107
    %123 = vmatpush.xpose.msra.mxu0 %v106
    %124 = vmatpush.xpose.msra.mxu0 %v105
    %125 = vmatpush.xpose.msra.mxu0 %v104
    %126 = vmatpush.xpose.msra.mxu0 %v103
    %127 = vmatpush.xpose.msra.mxu0 %v102
    %128 = vmatpush.xpose.msra.mxu0 %v101
    %129 = vmatpush.xpose.msra.mxu0 %v100
    %130 = vmatpush.xpose.msra.mxu0 %v99
    %131 = vmatmul.f32.gmra.mxu0 %v82
    %v132 = vpop.f32.mrf.mxu0
    %v133 = vadd.f32 0.0, %v132
    %134 = vdwg.mxu0
    %v135 = vld [vmem:[#allocation2] sm:$0xff]
    %v136 = vld [vmem:[%s6] sm:$0x1]
    %v138 = vperm.slane %v136, 0
    %v140 = vmul.f32 %v133, %v138
    %141 = vmatpush.xpose.msra.mxu0 %v98
    %142 = vmatpush.xpose.msra.mxu0 %v97
    %143 = vmatpush.xpose.msra.mxu0 %v96
    %144 = vmatpush.xpose.msra.mxu0 %v95
    %145 = vmatpush.xpose.msra.mxu0 %v94
    %146 = vmatpush.xpose.msra.mxu0 %v93
    %147 = vmatpush.xpose.msra.mxu0 %v92
    %148 = vmatpush.xpose.msra.mxu0 %v91
    %149 = vmatpush.xpose.msra.mxu0 %v90
    %150 = vmatpush.xpose.msra.mxu0 %v89
    %151 = vmatpush.xpose.msra.mxu0 %v88
    %152 = vmatpush.xpose.msra.mxu0 %v87
    %153 = vmatpush.xpose.msra.mxu0 %v86
    %154 = vmatpush.xpose.msra.mxu0 %v85
    %155 = vmatpush.xpose.msra.mxu0 %v84
    %156 = vmatpush.xpose.msra.mxu0 %v83
    %157 = vmatmul.f32.gmra.mxu0 %v77
    %v158 = vpop.f32.mrf.mxu0
    %v159 = vadd.f32 %v140, %v158
    %160 = vdwg.mxu0
    %v161 = vadd.f32 %v135, %v159
    %162 = vst [vmem:[#allocation2] sm:$0xff] %v161
    // Predicated region
    $region46: #{tpu_custom_call.1} parent=1 // pred_check
      %p163 = pneg %p72
    $region47: #{tpu_custom_call.1} parent=1 // pred_check_branch
      %165 = sbr.rel (%p163) target = $region49
    $region48: #{tpu_custom_call.1} parent=1 // pred_region
      %v166 = vld [vmem:[%s3] sm:$0x1]
      %v167 = vld [vmem:[%s4] sm:$0x1]
      %v168 = vld [vmem:[%s6] sm:$0x1]
      %v169 = vmul.f32 %v167, %v168
      %v170 = vadd.f32 %v166, %v169
      %v171 = vld [vmem:[#allocation2] sm:$0xff]
      %v173 = vperm.slane %v170, 0
      %v175 = vadd.f32 %v171, %v173
      %176 = vst [vmem:[#allocation9] sm:$0xff] %v175
    $region49: #{tpu_custom_call.1} parent=1 // pred_fallthru
      _
    // Predicated region
    $region50: #{tpu_custom_call.1} parent=1 // pred_check
      _
    $region51: #{tpu_custom_call.1} parent=1 // pred_check_branch
      %178 = sbr.rel (0) target = $region53
    $region52: #{tpu_custom_call.1} parent=1 // pred_region
      %180 = vsyncadd [#allocation5], 0
      %s182 = sshll.u32 [#allocation9], 4
      %s183 = int_to_ptr.vmem [resolvable:$true] %s182
      %s184 = sshll.u32 %s7, 4
      %s185 = int_to_ptr.hbm [resolvable:$true] %s184
      %187 = dma.vmem_to_hbm [thread:$0]  %s183, 128, %s185, [#allocation5]
    $region53: #{tpu_custom_call.1} parent=1 // pred_fallthru
      _
    // Predicated region
    $region54: #{tpu_custom_call.1} parent=1 // pred_check
      _
    $region55: #{tpu_custom_call.1} parent=1 // pred_check_branch
      %189 = sbr.rel (0) target = $region57
    $region56: #{tpu_custom_call.1} parent=1 // pred_region
      %191 = dma.done [#allocation5], 128
    $region57: #{tpu_custom_call.1} parent=1 // pred_fallthru
      _
    %192 = vsyncpa [#allocation4], 1
    %193 = vsyncpa [#allocation7], 1
    %194 = vsyncpa [#allocation5], 1

</llo_original>
